<compile_context>
chip_gen: v7x
topology: tpu7x:2x2x1
jax: 0.10.0
libtpu: 0.0.40
codegen_flags: <defaults>
</compile_context>

<pallas_src>
import jax
import jax.numpy as jnp
from jax.experimental import pallas as pl
from jax.experimental.pallas import tpu as pltpu

CLAMP_MIN = -0.206
CLAMP_MAX = -0.00268923


def conv1x1_clamp_kernel(x_ref, w_ref, b_ref, o_ref):
    # x_ref: [N, Cin, HW]   (channels on sublanes, spatial on lanes)
    # w_ref: [Cout, Cin]
    # b_ref: [Cout, 1]      (broadcasts over the lane axis)
    # o_ref: [N*Cout, HW]   (batches packed along sublanes -> lane-dense store)
    w = w_ref[...]
    b = b_ref[...]
    n_batch = x_ref.shape[0]
    cout = w.shape[0]
    # Static loop over the tiny batch (N = 3): three small MXU matmuls,
    # bias + both clamps fused before each store.
    for n in range(n_batch):
        acc = jnp.dot(w, x_ref[n], preferred_element_type=jnp.float32)
        acc = acc + b                       # bias broadcast over spatial lanes
        acc = jnp.maximum(acc, CLAMP_MIN)   # torch.clamp_min
        acc = jnp.minimum(acc, CLAMP_MAX)   # torch.clamp_max
        o_ref[n * cout:(n + 1) * cout, :] = acc.astype(o_ref.dtype)


def conv1x1_clamp(x_nchw, weight, bias):
    """x_nchw: [N, Cin, H, W]; weight: [Cout, Cin, 1, 1]; bias: [Cout]."""
    N, Cin, H, W = x_nchw.shape
    Cout = weight.shape[0]
    HW = H * W

    # Free reshapes only — no transposes / copies on the XLA side.
    x3d = x_nchw.reshape(N, Cin, HW)             # [N, Cin, HW]
    w2d = weight.reshape(Cout, Cin)              # [Cout, Cin]
    b2d = bias.reshape(Cout, 1)                  # [Cout, 1]

    out2d = pl.pallas_call(
        conv1x1_clamp_kernel,
        out_shape=jax.ShapeDtypeStruct((N * Cout, HW), x3d.dtype),
        grid_spec=pltpu.PrefetchScalarGridSpec(
            num_scalar_prefetch=0,
            grid=(1,),                            # single step: one DMA in/out
            in_specs=[
                # Full-array blocks (legal under the full-dimension exception
                # to the (8,128) rule).
                pl.BlockSpec((N, Cin, HW), lambda i: (0, 0, 0)),
                pl.BlockSpec((Cout, Cin), lambda i: (0, 0)),
                pl.BlockSpec((Cout, 1), lambda i: (0, 0)),
            ],
            out_specs=pl.BlockSpec((N * Cout, HW), lambda i: (0, 0)),
        ),
        compiler_params=pltpu.CompilerParams(
            dimension_semantics=("arbitrary",)),
    )(x3d, w2d, b2d)

    # Free reshape back to NCHW: row n*Cout + c of out2d is batch n, channel c.
    return out2d.reshape(N, Cout, H, W)


if __name__ == "__main__":
    key = jax.random.PRNGKey(0)
    kx, kw, kb = jax.random.split(key, 3)

    N, Cin, H, W, Cout = 3, 22, 25, 25, 3
    x1 = jax.random.normal(kx, (N, Cin, H, W), dtype=jnp.float32)

    # Deterministic parameter init (Conv2d(22, 3, 1) shapes), PyTorch-like uniform bound.
    bound = 1.0 / (Cin ** 0.5)
    weight = jax.random.uniform(kw, (Cout, Cin, 1, 1), minval=-bound, maxval=bound,
                                dtype=jnp.float32)
    bias = jax.random.uniform(kb, (Cout,), minval=-bound, maxval=bound, dtype=jnp.float32)

    out = conv1x1_clamp(x1, weight, bias)
    jax.block_until_ready(out)

    # Sanity check against pure-JAX reference.
    ref = jnp.einsum("nchw,oc->nohw", x1, weight.reshape(Cout, Cin)) + bias[None, :, None, None]
    ref = jnp.minimum(jnp.maximum(ref, CLAMP_MIN), CLAMP_MAX)
    assert out.shape == (N, Cout, H, W)
    assert jnp.allclose(out, ref, atol=1e-5, rtol=1e-5)

    print("KERNEL_OK")
</pallas_src>

<mosaic_0001>
module attributes {stable_mosaic.version = 11 : i64} {
  func.func @conv1x1_clamp_kernel(%arg0: i32, %arg1: memref<3x22x625xf32, #tpu.memory_space<vmem>>, %arg2: memref<3x22xf32, #tpu.memory_space<vmem>>, %arg3: memref<3x1xf32, #tpu.memory_space<vmem>>, %arg4: memref<9x625xf32, #tpu.memory_space<vmem>>) attributes {dimension_semantics = [#tpu.dimension_semantics<arbitrary>], iteration_bounds = array<i64: 1>, scalar_prefetch = 0 : i64, scratch_operands = 0 : i64, tpu.core_type = #tpu.core_type<tc>, window_params = [{pipeline_mode = #tpu.pipeline_mode<synchronous>, transform_indices = @transform_0, window_bounds = array<i64: 3, 22, 625>}, {pipeline_mode = #tpu.pipeline_mode<synchronous>, transform_indices = @transform_1, window_bounds = array<i64: 3, 22>}, {pipeline_mode = #tpu.pipeline_mode<synchronous>, transform_indices = @transform_2, window_bounds = array<i64: 3, 1>}, {pipeline_mode = #tpu.pipeline_mode<synchronous>, transform_indices = @transform_3, window_bounds = array<i64: 9, 625>}]} {
    %c0 = arith.constant 0 : index
    %c0_0 = arith.constant 0 : index
    %0 = vector.load %arg2[%c0, %c0_0] : memref<3x22xf32, #tpu.memory_space<vmem>>, vector<3x22xf32>
    %c0_1 = arith.constant 0 : index
    %c0_2 = arith.constant 0 : index
    %1 = vector.load %arg3[%c0_1, %c0_2] : memref<3x1xf32, #tpu.memory_space<vmem>>, vector<3x1xf32>
    %c0_3 = arith.constant 0 : index
    %c0_4 = arith.constant 0 : index
    %c0_5 = arith.constant 0 : index
    %2 = vector.load %arg1[%c0_3, %c0_4, %c0_5] : memref<3x22x625xf32, #tpu.memory_space<vmem>>, vector<1x22x625xf32>
    %3 = vector.shape_cast %2 : vector<1x22x625xf32> to vector<22x625xf32>
    %cst = arith.constant dense<0.000000e+00> : vector<3x625xf32>
    %4 = tpu.matmul %0, %3, %cst {dimension_numbers = #tpu.dot_dimension_numbers<[1], [0], [0], [1], [0, 0, 1, 1], [], []>} : vector<3x22xf32>, vector<22x625xf32>, vector<3x625xf32> -> vector<3x625xf32>
    %5 = vector.broadcast %1 : vector<3x1xf32> to vector<3x625xf32>
    %6 = arith.addf %4, %5 : vector<3x625xf32>
    %cst_6 = arith.constant -2.060000e-01 : f32
    %7 = vector.broadcast %cst_6 : f32 to vector<3x625xf32>
    %8 = arith.maximumf %6, %7 : vector<3x625xf32>
    %cst_7 = arith.constant -2.689230e-03 : f32
    %9 = vector.broadcast %cst_7 : f32 to vector<3x625xf32>
    %10 = arith.minimumf %8, %9 : vector<3x625xf32>
    %c0_8 = arith.constant 0 : index
    %c0_9 = arith.constant 0 : index
    %11 = vector.load %arg4[%c0_8, %c0_9] : memref<9x625xf32, #tpu.memory_space<vmem>>, vector<3x625xf32>
    tpu.vector_store %arg4[%c0_8, %c0_9], %10 {strides = array<i32>} : memref<9x625xf32, #tpu.memory_space<vmem>>, vector<3x625xf32>,
    %c1 = arith.constant 1 : index
    %c0_10 = arith.constant 0 : index
    %c0_11 = arith.constant 0 : index
    %12 = vector.load %arg1[%c1, %c0_10, %c0_11] : memref<3x22x625xf32, #tpu.memory_space<vmem>>, vector<1x22x625xf32>
    %13 = vector.shape_cast %12 : vector<1x22x625xf32> to vector<22x625xf32>
    %cst_12 = arith.constant dense<0.000000e+00> : vector<3x625xf32>
    %14 = tpu.matmul %0, %13, %cst_12 {dimension_numbers = #tpu.dot_dimension_numbers<[1], [0], [0], [1], [0, 0, 1, 1], [], []>} : vector<3x22xf32>, vector<22x625xf32>, vector<3x625xf32> -> vector<3x625xf32>
    %15 = vector.broadcast %1 : vector<3x1xf32> to vector<3x625xf32>
    %16 = arith.addf %14, %15 : vector<3x625xf32>
    %cst_13 = arith.constant -2.060000e-01 : f32
    %17 = vector.broadcast %cst_13 : f32 to vector<3x625xf32>
    %18 = arith.maximumf %16, %17 : vector<3x625xf32>
    %cst_14 = arith.constant -2.689230e-03 : f32
    %19 = vector.broadcast %cst_14 : f32 to vector<3x625xf32>
    %20 = arith.minimumf %18, %19 : vector<3x625xf32>
    %c3 = arith.constant 3 : index
    %c0_15 = arith.constant 0 : index
    %21 = vector.load %arg4[%c3, %c0_15] : memref<9x625xf32, #tpu.memory_space<vmem>>, vector<3x625xf32>
    tpu.vector_store %arg4[%c3, %c0_15], %20 {strides = array<i32>} : memref<9x625xf32, #tpu.memory_space<vmem>>, vector<3x625xf32>,
    %c2 = arith.constant 2 : index
    %c0_16 = arith.constant 0 : index
    %c0_17 = arith.constant 0 : index
    %22 = vector.load %arg1[%c2, %c0_16, %c0_17] : memref<3x22x625xf32, #tpu.memory_space<vmem>>, vector<1x22x625xf32>
    %23 = vector.shape_cast %22 : vector<1x22x625xf32> to vector<22x625xf32>
    %cst_18 = arith.constant dense<0.000000e+00> : vector<3x625xf32>
    %24 = tpu.matmul %0, %23, %cst_18 {dimension_numbers = #tpu.dot_dimension_numbers<[1], [0], [0], [1], [0, 0, 1, 1], [], []>} : vector<3x22xf32>, vector<22x625xf32>, vector<3x625xf32> -> vector<3x625xf32>
    %25 = vector.broadcast %1 : vector<3x1xf32> to vector<3x625xf32>
    %26 = arith.addf %24, %25 : vector<3x625xf32>
    %cst_19 = arith.constant -2.060000e-01 : f32
    %27 = vector.broadcast %cst_19 : f32 to vector<3x625xf32>
    %28 = arith.maximumf %26, %27 : vector<3x625xf32>
    %cst_20 = arith.constant -2.689230e-03 : f32
    %29 = vector.broadcast %cst_20 : f32 to vector<3x625xf32>
    %30 = arith.minimumf %28, %29 : vector<3x625xf32>
    %c6 = arith.constant 6 : index
    %c0_21 = arith.constant 0 : index
    %31 = vector.load %arg4[%c6, %c0_21] : memref<9x625xf32, #tpu.memory_space<vmem>>, vector<3x625xf32>
    tpu.vector_store %arg4[%c6, %c0_21], %30 {strides = array<i32>} : memref<9x625xf32, #tpu.memory_space<vmem>>, vector<3x625xf32>,
    return
  }
  func.func @transform_0(%arg0: i32) -> (i32, i32, i32) {
    %c0_i32 = arith.constant 0 : i32
    %c0_i32_0 = arith.constant 0 : i32
    %c0_i32_1 = arith.constant 0 : i32
    %c0_i32_2 = arith.constant 0 : i32
    return %c0_i32, %c0_i32_0, %c0_i32_1 : i32, i32, i32
  }
  func.func @transform_1(%arg0: i32) -> (i32, i32) {
    %c0_i32 = arith.constant 0 : i32
    %c0_i32_0 = arith.constant 0 : i32
    %c0_i32_1 = arith.constant 0 : i32
    return %c0_i32, %c0_i32_0 : i32, i32
  }
  func.func @transform_2(%arg0: i32) -> (i32, i32) {
    %c0_i32 = arith.constant 0 : i32
    %c0_i32_0 = arith.constant 0 : i32
    %c0_i32_1 = arith.constant 0 : i32
    return %c0_i32, %c0_i32_0 : i32, i32
  }
  func.func @transform_3(%arg0: i32) -> (i32, i32) {
    %c0_i32 = arith.constant 0 : i32
    %c0_i32_0 = arith.constant 0 : i32
    %c0_i32_1 = arith.constant 0 : i32
    return %c0_i32, %c0_i32_0 : i32, i32
  }
}

</mosaic_0001>

<llo_original>
// kernel: tpu_custom_call.1
$region0: #{tpu_custom_call.1}
  #allocation0 [shape = 'u32[]', space=smem, size = 0x4, offset = 0x4, fixed_abs, tag = 'smem constant byte address 0x4 - core index']
  #allocation1 [shape = 'u32[144,128]{1,0:T(1,128)}', space=vmem, size = 0x12000, scoped, tag = 'internal scratch']
  %s0 = inlined_call_operand.hbm [shape: f32[3,22,625], index: 0, kind: input, shape index: {}]
  %s1 = inlined_call_operand.vmem [shape: f32[3,22], index: 1, kind: input, shape index: {}]
  %s2 = inlined_call_operand.vmem [shape: f32[3,1], index: 2, kind: input, shape index: {}]
  %s3 = inlined_call_operand.hbm [shape: f32[9,625], index: 3, kind: output, shape index: {}]
  %s4 = sld [smem:[#allocation0]]
  $region26: #{tpu_custom_call.1} parent=0
    _
  %s6 = ssub.s32 1, %s4
  %s7 = scalar_select 0, %s6, %s4
  $region1: #{tpu_custom_call.1} parent=0
    #allocation2 [shape = 'u8[184320]{0}', space=vmem, size = 0x2d000, scoped, tag = 'input window, operand 0, single buffered']
    #allocation3 [shape = 's32[1]{0}', space=sflag, size = 0x4, scoped, tag = 'scoped memory for tpu_custom_call.1']
    #allocation4 [shape = 's32[1]{0}', space=sflag, size = 0x4, scoped, tag = 'scoped memory for tpu_custom_call.1']
    #allocation5 [shape = 'u8[40960]{0}', space=vmem, size = 0xa000, scoped, tag = 'output window, operand 0, single buffered']
    %8 = vsyncpa [#allocation3], 0
    %9 = vsyncpa [#allocation4], 0
    // Predicated region
    $region2: #{tpu_custom_call.1} parent=1 // pred_check
      _
    $region3: #{tpu_custom_call.1} parent=1 // pred_check_branch
      %11 = sbr.rel (0) target = $region5
    $region4: #{tpu_custom_call.1} parent=1 // pred_region
      %s13 = ssub.s32 5760, 5760
      %14 = vsyncadd [#allocation3], %s13
      %s15 = sshll.u32 [#allocation2], 4
      %s16 = int_to_ptr.vmem [resolvable:$true] %s15
      %21 = dma.hbm_to_vmem [thread:$0]  %s0, 5760, %s16, [#allocation3], 640, 640, 40
    $region5: #{tpu_custom_call.1} parent=1 // pred_fallthru
      _
    // Predicated region
    $region6: #{tpu_custom_call.1} parent=1 // pred_check
      _
    $region7: #{tpu_custom_call.1} parent=1 // pred_check_branch
      %23 = sbr.rel (0) target = $region9
    $region8: #{tpu_custom_call.1} parent=1 // pred_region
      _
    $region9: #{tpu_custom_call.1} parent=1 // pred_fallthru
      _
    // Predicated region
    $region10: #{tpu_custom_call.1} parent=1 // pred_check
      _
    $region11: #{tpu_custom_call.1} parent=1 // pred_check_branch
      %25 = sbr.rel (0) target = $region13
    $region12: #{tpu_custom_call.1} parent=1 // pred_region
      _
    $region13: #{tpu_custom_call.1} parent=1 // pred_fallthru
      _
    // Predicated region
    $region14: #{tpu_custom_call.1} parent=1 // pred_check
      _
    $region15: #{tpu_custom_call.1} parent=1 // pred_check_branch
      %27 = sbr.rel (0) target = $region17
    $region16: #{tpu_custom_call.1} parent=1 // pred_region
      %28 = dma.done [#allocation3], 5760
    $region17: #{tpu_custom_call.1} parent=1 // pred_fallthru
      _
    %v29 = vld [vmem:[%s1] sm:$0x7]
    %v30 = vld [vmem:[%s2] sm:$0x7]
    %v31 = vld [vmem:[#allocation2] sm:$0xff]
    %v32 = vld [vmem:[#allocation2 + $0x8] sm:$0xff]
    %v33 = vld [vmem:[#allocation2 + $0x10] sm:$0xff]
    %v34 = vld [vmem:[#allocation2 + $0x18] sm:$0xff]
    %v35 = vld [vmem:[#allocation2 + $0x20] sm:$0xff]
    %v36 = vld [vmem:[#allocation2 + $0x28] sm:$0xff]
    %v37 = vld [vmem:[#allocation2 + $0x30] sm:$0xff]
    %v38 = vld [vmem:[#allocation2 + $0x38] sm:$0xff]
    %v39 = vld [vmem:[#allocation2 + $0x40] sm:$0xff]
    %v40 = vld [vmem:[#allocation2 + $0x48] sm:$0xff]
    %v41 = vld [vmem:[#allocation2 + $0x50] sm:$0x3f]
    %v42 = vld [vmem:[#allocation2 + $0x58] sm:$0x3f]
    %v43 = vld [vmem:[#allocation2 + $0x60] sm:$0x3f]
    %v44 = vld [vmem:[#allocation2 + $0x68] sm:$0x3f]
    %v45 = vld [vmem:[#allocation2 + $0x70] sm:$0x3f]
    %47 = vset.pattern.permute.xlu0 0
    %48 = vperm.xlu0 %47, %v30
    %v49 = vpop.permute.xlu0 %48
    %vm51 = vcmask 179200
    %v53 = vsel %vm51, %v29, 0
    %vm55 = vcmask 1045504
    %v57 = vsel %vm55, %v41, 0
    %v60 = vsel %vm55, %v42, 0
    %v63 = vsel %vm55, %v43, 0
    %v66 = vsel %vm55, %v44, 0
    %v69 = vsel %vm55, %v45, 0
    %71 = vmatprep.subr.mxu0 %v32
    %72 = vmatpush1.msra.mxu0 %v31
    %73 = vmatprep.subr.mxu0 %v37
    %74 = vmatpush1.msra.mxu0 %v36
    %75 = vmatprep.subr.mxu0 %v60
    %76 = vmatpush1.msra.mxu0 %v57
    %77 = vmatprep.subr.mxu0 0.0
    %78 = vmatpush1.msra.mxu0 0.0
    %79 = vmatprep.subr.mxu0 0.0
    %80 = vmatpush1.msra.mxu0 0.0
    %81 = vmatprep.subr.mxu0 0.0
    %82 = vmatpush1.msra.mxu0 0.0
    %83 = vmatprep.subr.mxu0 0.0
    %84 = vmatpush1.msra.mxu0 0.0
    %85 = vmatprep.subr.mxu0 0.0
    %86 = vmatpush1.msra.mxu0 0.0
    %87 = vmatprep.subr.mxu0 0.0
    %88 = vmatpush1.msra.mxu0 0.0
    %89 = vmatprep.subr.mxu0 0.0
    %90 = vmatpush1.msra.mxu0 0.0
    %91 = vmatprep.subr.mxu0 0.0
    %92 = vmatpush1.msra.mxu0 0.0
    %93 = vmatprep.subr.mxu0 0.0
    %94 = vmatpush1.msra.mxu0 0.0
    %95 = vmatprep.subr.mxu0 0.0
    %96 = vmatpush1.msra.mxu0 0.0
    %97 = vmatprep.subr.mxu0 0.0
    %98 = vmatpush1.msra.mxu0 0.0
    %99 = vmatprep.subr.mxu0 0.0
    %100 = vmatpush1.msra.mxu0 0.0
    %101 = vmatprep.subr.mxu0 0.0
    %102 = vmatpush1.msra.mxu0 0.0
    %103 = vmatprep.subr.mxu0 0.0
    %104 = vmatpush1.msra.mxu0 0.0
    %105 = vmatprep.subr.mxu0 0.0
    %106 = vmatpush1.msra.mxu0 0.0
    %107 = vmatprep.subr.mxu0 0.0
    %108 = vmatpush1.msra.mxu0 0.0
    %109 = vmatprep.subr.mxu0 0.0
    %110 = vmatpush1.msra.mxu0 0.0
    %111 = vmatprep.subr.mxu0 0.0
    %112 = vmatpush1.msra.mxu0 0.0
    %113 = vmatprep.subr.mxu0 0.0
    %114 = vmatpush1.msra.mxu0 0.0
    %115 = vmatprep.subr.mxu0 0.0
    %116 = vmatpush1.msra.mxu0 0.0
    %117 = vmatprep.subr.mxu0 0.0
    %118 = vmatpush1.msra.mxu0 0.0
    %119 = vmatprep.subr.mxu0 0.0
    %120 = vmatpush1.msra.mxu0 0.0
    %121 = vmatprep.subr.mxu0 0.0
    %122 = vmatpush1.msra.mxu0 0.0
    %123 = vmatprep.subr.mxu0 0.0
    %124 = vmatpush1.msra.mxu0 0.0
    %125 = vmatprep.subr.mxu0 0.0
    %126 = vmatpush1.msra.mxu0 0.0
    %127 = vmatprep.subr.mxu0 0.0
    %128 = vmatpush1.msra.mxu0 0.0
    %129 = vmatprep.subr.mxu0 0.0
    %130 = vmatpush1.msra.mxu0 0.0
    %131 = vmatprep.subr.mxu0 0.0
    %132 = vmatpush1.msra.mxu0 0.0
    %133 = vmatprep.subr.mxu0 0.0
    %134 = vmatpush1.msra.mxu0 0.0
    %135 = vmatprep.mubr.f32.mxu0 0.0
    %136 = vmatmul.mubr.f32.gmra.mrb[0].mxu0 %v53
    %v137 = vpop.f32.mrb[0].mxu0
    %v138 = vadd.f32 %v49, %v137
    %v139 = vpop.f32.mrb[0].mxu0
    %v140 = vadd.f32 %v49, %v139
    %141 = vdwg.mxu0
    %142 = vmatprep.subr.mxu0 %v34
    %143 = vmatpush1.msra.mxu0 %v33
    %144 = vmatprep.subr.mxu0 %v39
    %145 = vmatpush1.msra.mxu0 %v38
    %146 = vmatprep.subr.mxu0 %v66
    %147 = vmatpush1.msra.mxu0 %v63
    %148 = vmatprep.subr.mxu0 0.0
    %149 = vmatpush1.msra.mxu0 0.0
    %150 = vmatprep.subr.mxu0 0.0
    %151 = vmatpush1.msra.mxu0 0.0
    %152 = vmatprep.subr.mxu0 0.0
    %153 = vmatpush1.msra.mxu0 0.0
    %154 = vmatprep.subr.mxu0 0.0
    %155 = vmatpush1.msra.mxu0 0.0
    %156 = vmatprep.subr.mxu0 0.0
    %157 = vmatpush1.msra.mxu0 0.0
    %158 = vmatprep.subr.mxu0 0.0
    %159 = vmatpush1.msra.mxu0 0.0
    %160 = vmatprep.subr.mxu0 0.0
    %161 = vmatpush1.msra.mxu0 0.0
    %162 = vmatprep.subr.mxu0 0.0
    %163 = vmatpush1.msra.mxu0 0.0
    %164 = vmatprep.subr.mxu0 0.0
    %165 = vmatpush1.msra.mxu0 0.0
    %166 = vmatprep.subr.mxu0 0.0
    %167 = vmatpush1.msra.mxu0 0.0
    %168 = vmatprep.subr.mxu0 0.0
    %169 = vmatpush1.msra.mxu0 0.0
    %170 = vmatprep.subr.mxu0 0.0
    %171 = vmatpush1.msra.mxu0 0.0
    %172 = vmatprep.subr.mxu0 0.0
    %173 = vmatpush1.msra.mxu0 0.0
    %174 = vmatprep.subr.mxu0 0.0
    %175 = vmatpush1.msra.mxu0 0.0
    %176 = vmatprep.subr.mxu0 0.0
    %177 = vmatpush1.msra.mxu0 0.0
    %178 = vmatprep.subr.mxu0 0.0
    %179 = vmatpush1.msra.mxu0 0.0
    %180 = vmatprep.subr.mxu0 0.0
    %181 = vmatpush1.msra.mxu0 0.0
    %182 = vmatprep.subr.mxu0 0.0
    %183 = vmatpush1.msra.mxu0 0.0
    %184 = vmatprep.subr.mxu0 0.0
    %185 = vmatpush1.msra.mxu0 0.0
    %186 = vmatprep.subr.mxu0 0.0
    %187 = vmatpush1.msra.mxu0 0.0
    %188 = vmatprep.subr.mxu0 0.0
    %189 = vmatpush1.msra.mxu0 0.0
    %190 = vmatprep.subr.mxu0 0.0
    %191 = vmatpush1.msra.mxu0 0.0
    %192 = vmatprep.subr.mxu0 0.0
    %193 = vmatpush1.msra.mxu0 0.0
    %194 = vmatprep.subr.mxu0 0.0
    %195 = vmatpush1.msra.mxu0 0.0
    %196 = vmatprep.subr.mxu0 0.0
    %197 = vmatpush1.msra.mxu0 0.0
    %198 = vmatprep.subr.mxu0 0.0
    %199 = vmatpush1.msra.mxu0 0.0
    %200 = vmatprep.subr.mxu0 0.0
    %201 = vmatpush1.msra.mxu0 0.0
    %202 = vmatprep.subr.mxu0 0.0
    %203 = vmatpush1.msra.mxu0 0.0
    %204 = vmatprep.subr.mxu0 0.0
    %205 = vmatpush1.msra.mxu0 0.0
    %206 = vmatprep.mubr.f32.mxu0 0.0
    %207 = vmatmul.mubr.f32.gmra.mrb[0].mxu0 %v53
    %v208 = vpop.f32.mrb[0].mxu0
    %v209 = vadd.f32 %v49, %v208
    %v210 = vpop.f32.mrb[0].mxu0
    %v211 = vadd.f32 %v49, %v210
    %212 = vdwg.mxu0
    %213 = vmatprep.subr.mxu0 0.0
    %214 = vmatpush1.msra.mxu0 %v35
    %215 = vmatprep.subr.mxu0 0.0
    %216 = vmatpush1.msra.mxu0 %v40
    %217 = vmatprep.subr.mxu0 0.0
    %218 = vmatpush1.msra.mxu0 %v69
    %219 = vmatprep.subr.mxu0 0.0
    %220 = vmatpush1.msra.mxu0 0.0
    %221 = vmatprep.subr.mxu0 0.0
    %222 = vmatpush1.msra.mxu0 0.0
    %223 = vmatprep.subr.mxu0 0.0
    %224 = vmatpush1.msra.mxu0 0.0
    %225 = vmatprep.subr.mxu0 0.0
    %226 = vmatpush1.msra.mxu0 0.0
    %227 = vmatprep.subr.mxu0 0.0
    %228 = vmatpush1.msra.mxu0 0.0
    %229 = vmatprep.subr.mxu0 0.0
    %230 = vmatpush1.msra.mxu0 0.0
    %231 = vmatprep.subr.mxu0 0.0
    %232 = vmatpush1.msra.mxu0 0.0
    %233 = vmatprep.subr.mxu0 0.0
    %234 = vmatpush1.msra.mxu0 0.0
    %235 = vmatprep.subr.mxu0 0.0
    %236 = vmatpush1.msra.mxu0 0.0
    %237 = vmatprep.subr.mxu0 0.0
    %238 = vmatpush1.msra.mxu0 0.0
    %239 = vmatprep.subr.mxu0 0.0
    %240 = vmatpush1.msra.mxu0 0.0
    %241 = vmatprep.subr.mxu0 0.0
    %242 = vmatpush1.msra.mxu0 0.0
    %243 = vmatprep.subr.mxu0 0.0
    %244 = vmatpush1.msra.mxu0 0.0
    %245 = vmatprep.subr.mxu0 0.0
    %246 = vmatpush1.msra.mxu0 0.0
    %247 = vmatprep.subr.mxu0 0.0
    %248 = vmatpush1.msra.mxu0 0.0
    %249 = vmatprep.subr.mxu0 0.0
    %250 = vmatpush1.msra.mxu0 0.0
    %251 = vmatprep.subr.mxu0 0.0
    %252 = vmatpush1.msra.mxu0 0.0
    %253 = vmatprep.subr.mxu0 0.0
    %254 = vmatpush1.msra.mxu0 0.0
    %255 = vmatprep.subr.mxu0 0.0
    %256 = vmatpush1.msra.mxu0 0.0
    %257 = vmatprep.subr.mxu0 0.0
    %258 = vmatpush1.msra.mxu0 0.0
    %259 = vmatprep.subr.mxu0 0.0
    %260 = vmatpush1.msra.mxu0 0.0
    %261 = vmatprep.subr.mxu0 0.0
    %262 = vmatpush1.msra.mxu0 0.0
    %263 = vmatprep.subr.mxu0 0.0
    %264 = vmatpush1.msra.mxu0 0.0
    %265 = vmatprep.subr.mxu0 0.0
    %266 = vmatpush1.msra.mxu0 0.0
    %267 = vmatprep.subr.mxu0 0.0
    %268 = vmatpush1.msra.mxu0 0.0
    %269 = vmatprep.subr.mxu0 0.0
    %270 = vmatpush1.msra.mxu0 0.0
    %271 = vmatprep.subr.mxu0 0.0
    %272 = vmatpush1.msra.mxu0 0.0
    %273 = vmatprep.subr.mxu0 0.0
    %274 = vmatpush1.msra.mxu0 0.0
    %275 = vmatprep.subr.mxu0 0.0
    %276 = vmatpush1.msra.mxu0 0.0
    %277 = vmatprep.mubr.f32.mxu0 0.0
    %278 = vmatmul.mubr.f32.gmra.mrb[0].mxu0 %v53
    %v279 = vpop.f32.mrb[0].mxu0
    %v280 = vadd.f32 %v49, %v279
    %v281 = vpop.f32.mrb[0].mxu0
    %282 = vdwg.mxu0
    %v283 = vmax.f32 %v138, -0.206
    %v284 = vmax.f32 %v140, -0.206
    %v285 = vmax.f32 %v209, -0.206
    %v286 = vmax.f32 %v211, -0.206
    %v287 = vmax.f32 %v280, -0.206
    %v288 = vmin.f32 %v283, -0.00268923
    %v289 = vmin.f32 %v284, -0.00268923
    %v290 = vmin.f32 %v285, -0.00268923
    %v291 = vmin.f32 %v286, -0.00268923
    %v292 = vmin.f32 %v287, -0.00268923
    %293 = vst [vmem:[#allocation5] sm:$0x7] %v288
    %294 = vst [vmem:[#allocation5 + $0x8] sm:$0x7] %v289
    %295 = vst [vmem:[#allocation5 + $0x10] sm:$0x7] %v290
    %296 = vst [vmem:[#allocation5 + $0x18] sm:$0x7] %v291
    %vm297 = vcmask 919552
    %298 = vst.msk [vmem:[#allocation5 + $0x20] sm:$0x7] %vm297, %v292
    %s299 = scalar_lea.vmem [#allocation2], 120
    %v300 = vld [vmem:[%s299] sm:$0xff]
    %v301 = vld [vmem:[%s299 + $0x8] sm:$0xff]
    %v302 = vld [vmem:[%s299 + $0x10] sm:$0xff]
    %v303 = vld [vmem:[%s299 + $0x18] sm:$0xff]
    %v304 = vld [vmem:[%s299 + $0x20] sm:$0xff]
    %v305 = vld [vmem:[%s299 + $0x28] sm:$0xff]
    %v306 = vld [vmem:[%s299 + $0x30] sm:$0xff]
    %v307 = vld [vmem:[%s299 + $0x38] sm:$0xff]
    %v308 = vld [vmem:[%s299 + $0x40] sm:$0xff]
    %v309 = vld [vmem:[%s299 + $0x48] sm:$0xff]
    %v310 = vld [vmem:[%s299 + $0x50] sm:$0x3f]
    %v311 = vld [vmem:[%s299 + $0x58] sm:$0x3f]
    %v312 = vld [vmem:[%s299 + $0x60] sm:$0x3f]
    %v313 = vld [vmem:[%s299 + $0x68] sm:$0x3f]
    %v314 = vld [vmem:[%s299 + $0x70] sm:$0x3f]
    %v316 = vsel %vm55, %v310, 0
    %v319 = vsel %vm55, %v311, 0
    %v322 = vsel %vm55, %v312, 0
    %v325 = vsel %vm55, %v313, 0
    %v328 = vsel %vm55, %v314, 0
    %330 = vmatprep.subr.mxu0 %v301
    %331 = vmatpush1.msra.mxu0 %v300
    %332 = vmatprep.subr.mxu0 %v306
    %333 = vmatpush1.msra.mxu0 %v305
    %334 = vmatprep.subr.mxu0 %v319
    %335 = vmatpush1.msra.mxu0 %v316
    %336 = vmatprep.subr.mxu0 0.0
    %337 = vmatpush1.msra.mxu0 0.0
    %338 = vmatprep.subr.mxu0 0.0
    %339 = vmatpush1.msra.mxu0 0.0
    %340 = vmatprep.subr.mxu0 0.0
    %341 = vmatpush1.msra.mxu0 0.0
    %342 = vmatprep.subr.mxu0 0.0
    %343 = vmatpush1.msra.mxu0 0.0
    %344 = vmatprep.subr.mxu0 0.0
    %345 = vmatpush1.msra.mxu0 0.0
    %346 = vmatprep.subr.mxu0 0.0
    %347 = vmatpush1.msra.mxu0 0.0
    %348 = vmatprep.subr.mxu0 0.0
    %349 = vmatpush1.msra.mxu0 0.0
    %350 = vmatprep.subr.mxu0 0.0
    %351 = vmatpush1.msra.mxu0 0.0
    %352 = vmatprep.subr.mxu0 0.0
    %353 = vmatpush1.msra.mxu0 0.0
    %354 = vmatprep.subr.mxu0 0.0
    %355 = vmatpush1.msra.mxu0 0.0
    %356 = vmatprep.subr.mxu0 0.0
    %357 = vmatpush1.msra.mxu0 0.0
    %358 = vmatprep.subr.mxu0 0.0
    %359 = vmatpush1.msra.mxu0 0.0
    %360 = vmatprep.subr.mxu0 0.0
    %361 = vmatpush1.msra.mxu0 0.0
    %362 = vmatprep.subr.mxu0 0.0
    %363 = vmatpush1.msra.mxu0 0.0
    %364 = vmatprep.subr.mxu0 0.0
    %365 = vmatpush1.msra.mxu0 0.0
    %366 = vmatprep.subr.mxu0 0.0
    %367 = vmatpush1.msra.mxu0 0.0
    %368 = vmatprep.subr.mxu0 0.0
    %369 = vmatpush1.msra.mxu0 0.0
    %370 = vmatprep.subr.mxu0 0.0
    %371 = vmatpush1.msra.mxu0 0.0
    %372 = vmatprep.subr.mxu0 0.0
    %373 = vmatpush1.msra.mxu0 0.0
    %374 = vmatprep.subr.mxu0 0.0
    %375 = vmatpush1.msra.mxu0 0.0
    %376 = vmatprep.subr.mxu0 0.0
    %377 = vmatpush1.msra.mxu0 0.0
    %378 = vmatprep.subr.mxu0 0.0
    %379 = vmatpush1.msra.mxu0 0.0
    %380 = vmatprep.subr.mxu0 0.0
    %381 = vmatpush1.msra.mxu0 0.0
    %382 = vmatprep.subr.mxu0 0.0
    %383 = vmatpush1.msra.mxu0 0.0
    %384 = vmatprep.subr.mxu0 0.0
    %385 = vmatpush1.msra.mxu0 0.0
    %386 = vmatprep.subr.mxu0 0.0
    %387 = vmatpush1.msra.mxu0 0.0
    %388 = vmatprep.subr.mxu0 0.0
    %389 = vmatpush1.msra.mxu0 0.0
    %390 = vmatprep.subr.mxu0 0.0
    %391 = vmatpush1.msra.mxu0 0.0
    %392 = vmatprep.subr.mxu0 0.0
    %393 = vmatpush1.msra.mxu0 0.0
    %394 = vmatprep.mubr.f32.mxu0 0.0
    %395 = vmatmul.mubr.f32.gmra.mrb[0].mxu0 %v53
    %v396 = vpop.f32.mrb[0].mxu0
    %v397 = vadd.f32 %v49, %v396
    %v398 = vpop.f32.mrb[0].mxu0
    %v399 = vadd.f32 %v49, %v398
    %400 = vdwg.mxu0
    %401 = vmatprep.subr.mxu0 %v303
    %402 = vmatpush1.msra.mxu0 %v302
    %403 = vmatprep.subr.mxu0 %v308
    %404 = vmatpush1.msra.mxu0 %v307
    %405 = vmatprep.subr.mxu0 %v325
    %406 = vmatpush1.msra.mxu0 %v322
    %407 = vmatprep.subr.mxu0 0.0
    %408 = vmatpush1.msra.mxu0 0.0
    %409 = vmatprep.subr.mxu0 0.0
    %410 = vmatpush1.msra.mxu0 0.0
    %411 = vmatprep.subr.mxu0 0.0
    %412 = vmatpush1.msra.mxu0 0.0
    %413 = vmatprep.subr.mxu0 0.0
    %414 = vmatpush1.msra.mxu0 0.0
    %415 = vmatprep.subr.mxu0 0.0
    %416 = vmatpush1.msra.mxu0 0.0
    %417 = vmatprep.subr.mxu0 0.0
    %418 = vmatpush1.msra.mxu0 0.0
    %419 = vmatprep.subr.mxu0 0.0
    %420 = vmatpush1.msra.mxu0 0.0
    %421 = vmatprep.subr.mxu0 0.0
    %422 = vmatpush1.msra.mxu0 0.0
    %423 = vmatprep.subr.mxu0 0.0
    %424 = vmatpush1.msra.mxu0 0.0
    %425 = vmatprep.subr.mxu0 0.0
    %426 = vmatpush1.msra.mxu0 0.0
    %427 = vmatprep.subr.mxu0 0.0
    %428 = vmatpush1.msra.mxu0 0.0
    %429 = vmatprep.subr.mxu0 0.0
    %430 = vmatpush1.msra.mxu0 0.0
    %431 = vmatprep.subr.mxu0 0.0
    %432 = vmatpush1.msra.mxu0 0.0
    %433 = vmatprep.subr.mxu0 0.0
    %434 = vmatpush1.msra.mxu0 0.0
    %435 = vmatprep.subr.mxu0 0.0
    %436 = vmatpush1.msra.mxu0 0.0
    %437 = vmatprep.subr.mxu0 0.0
    %438 = vmatpush1.msra.mxu0 0.0
    %439 = vmatprep.subr.mxu0 0.0
    %440 = vmatpush1.msra.mxu0 0.0
    %441 = vmatprep.subr.mxu0 0.0
    %442 = vmatpush1.msra.mxu0 0.0
    %443 = vmatprep.subr.mxu0 0.0
    %444 = vmatpush1.msra.mxu0 0.0
    %445 = vmatprep.subr.mxu0 0.0
    %446 = vmatpush1.msra.mxu0 0.0
    %447 = vmatprep.subr.mxu0 0.0
    %448 = vmatpush1.msra.mxu0 0.0
    %449 = vmatprep.subr.mxu0 0.0
    %450 = vmatpush1.msra.mxu0 0.0
    %451 = vmatprep.subr.mxu0 0.0
    %452 = vmatpush1.msra.mxu0 0.0
    %453 = vmatprep.subr.mxu0 0.0
    %454 = vmatpush1.msra.mxu0 0.0
    %455 = vmatprep.subr.mxu0 0.0
    %456 = vmatpush1.msra.mxu0 0.0
    %457 = vmatprep.subr.mxu0 0.0
    %458 = vmatpush1.msra.mxu0 0.0
    %459 = vmatprep.subr.mxu0 0.0
    %460 = vmatpush1.msra.mxu0 0.0
    %461 = vmatprep.subr.mxu0 0.0
    %462 = vmatpush1.msra.mxu0 0.0
    %463 = vmatprep.subr.mxu0 0.0
    %464 = vmatpush1.msra.mxu0 0.0
    %465 = vmatprep.mubr.f32.mxu0 0.0
    %466 = vmatmul.mubr.f32.gmra.mrb[0].mxu0 %v53
    %v467 = vpop.f32.mrb[0].mxu0
    %v468 = vadd.f32 %v49, %v467
    %v469 = vpop.f32.mrb[0].mxu0
    %v470 = vadd.f32 %v49, %v469
    %471 = vdwg.mxu0
    %472 = vmatprep.subr.mxu0 0.0
    %473 = vmatpush1.msra.mxu0 %v304
    %474 = vmatprep.subr.mxu0 0.0
    %475 = vmatpush1.msra.mxu0 %v309
    %476 = vmatprep.subr.mxu0 0.0
    %477 = vmatpush1.msra.mxu0 %v328
    %478 = vmatprep.subr.mxu0 0.0
    %479 = vmatpush1.msra.mxu0 0.0
    %480 = vmatprep.subr.mxu0 0.0
    %481 = vmatpush1.msra.mxu0 0.0
    %482 = vmatprep.subr.mxu0 0.0
    %483 = vmatpush1.msra.mxu0 0.0
    %484 = vmatprep.subr.mxu0 0.0
    %485 = vmatpush1.msra.mxu0 0.0
    %486 = vmatprep.subr.mxu0 0.0
    %487 = vmatpush1.msra.mxu0 0.0
    %488 = vmatprep.subr.mxu0 0.0
    %489 = vmatpush1.msra.mxu0 0.0
    %490 = vmatprep.subr.mxu0 0.0
    %491 = vmatpush1.msra.mxu0 0.0
    %492 = vmatprep.subr.mxu0 0.0
    %493 = vmatpush1.msra.mxu0 0.0
    %494 = vmatprep.subr.mxu0 0.0
    %495 = vmatpush1.msra.mxu0 0.0
    %496 = vmatprep.subr.mxu0 0.0
    %497 = vmatpush1.msra.mxu0 0.0
    %498 = vmatprep.subr.mxu0 0.0
    %499 = vmatpush1.msra.mxu0 0.0
    %500 = vmatprep.subr.mxu0 0.0
    %501 = vmatpush1.msra.mxu0 0.0
    %502 = vmatprep.subr.mxu0 0.0
    %503 = vmatpush1.msra.mxu0 0.0
    %504 = vmatprep.subr.mxu0 0.0
    %505 = vmatpush1.msra.mxu0 0.0
    %506 = vmatprep.subr.mxu0 0.0
    %507 = vmatpush1.msra.mxu0 0.0
    %508 = vmatprep.subr.mxu0 0.0
    %509 = vmatpush1.msra.mxu0 0.0
    %510 = vmatprep.subr.mxu0 0.0
    %511 = vmatpush1.msra.mxu0 0.0
    %512 = vmatprep.subr.mxu0 0.0
    %513 = vmatpush1.msra.mxu0 0.0
    %514 = vmatprep.subr.mxu0 0.0
    %515 = vmatpush1.msra.mxu0 0.0
    %516 = vmatprep.subr.mxu0 0.0
    %517 = vmatpush1.msra.mxu0 0.0
    %518 = vmatprep.subr.mxu0 0.0
    %519 = vmatpush1.msra.mxu0 0.0
    %520 = vmatprep.subr.mxu0 0.0
    %521 = vmatpush1.msra.mxu0 0.0
    %522 = vmatprep.subr.mxu0 0.0
    %523 = vmatpush1.msra.mxu0 0.0
    %524 = vmatprep.subr.mxu0 0.0
    %525 = vmatpush1.msra.mxu0 0.0
    %526 = vmatprep.subr.mxu0 0.0
    %527 = vmatpush1.msra.mxu0 0.0
    %528 = vmatprep.subr.mxu0 0.0
    %529 = vmatpush1.msra.mxu0 0.0
    %530 = vmatprep.subr.mxu0 0.0
    %531 = vmatpush1.msra.mxu0 0.0
    %532 = vmatprep.subr.mxu0 0.0
    %533 = vmatpush1.msra.mxu0 0.0
    %534 = vmatprep.subr.mxu0 0.0
    %535 = vmatpush1.msra.mxu0 0.0
    %536 = vmatprep.mubr.f32.mxu0 0.0
    %537 = vmatmul.mubr.f32.gmra.mrb[0].mxu0 %v53
    %v538 = vpop.f32.mrb[0].mxu0
    %v539 = vadd.f32 %v49, %v538
    %v540 = vpop.f32.mrb[0].mxu0
    %541 = vdwg.mxu0
    %v542 = vmax.f32 %v397, -0.206
    %v543 = vmax.f32 %v399, -0.206
    %v544 = vmax.f32 %v468, -0.206
    %v545 = vmax.f32 %v470, -0.206
    %v546 = vmax.f32 %v539, -0.206
    %v547 = vmin.f32 %v542, -0.00268923
    %v548 = vmin.f32 %v543, -0.00268923
    %v549 = vmin.f32 %v544, -0.00268923
    %v550 = vmin.f32 %v545, -0.00268923
    %v551 = vmin.f32 %v546, -0.00268923
    %v557 = vrot.slane %v547, 5
    %v558 = vrot.slane %v548, 5
    %v559 = vrot.slane %v549, 5
    %v560 = vrot.slane %v550, 5
    %v561 = vrot.slane %v551, 5
    %567 = vst [vmem:[#allocation5] sm:$0x38] %v557
    %568 = vst [vmem:[#allocation5 + $0x8] sm:$0x38] %v558
    %569 = vst [vmem:[#allocation5 + $0x10] sm:$0x38] %v559
    %570 = vst [vmem:[#allocation5 + $0x18] sm:$0x38] %v560
    %vm571 = vcmask 922627
    %572 = vst.msk [vmem:[#allocation5 + $0x20] sm:$0x38] %vm571, %v561
    %s573 = scalar_lea.vmem [#allocation2], 240
    %v574 = vld [vmem:[%s573] sm:$0xff]
    %v575 = vld [vmem:[%s573 + $0x8] sm:$0xff]
    %v576 = vld [vmem:[%s573 + $0x10] sm:$0xff]
    %v577 = vld [vmem:[%s573 + $0x18] sm:$0xff]
    %v578 = vld [vmem:[%s573 + $0x20] sm:$0xff]
    %v579 = vld [vmem:[%s573 + $0x28] sm:$0xff]
    %v580 = vld [vmem:[%s573 + $0x30] sm:$0xff]
    %v581 = vld [vmem:[%s573 + $0x38] sm:$0xff]
    %v582 = vld [vmem:[%s573 + $0x40] sm:$0xff]
    %v583 = vld [vmem:[%s573 + $0x48] sm:$0xff]
    %v584 = vld [vmem:[%s573 + $0x50] sm:$0x3f]
    %v585 = vld [vmem:[%s573 + $0x58] sm:$0x3f]
    %v586 = vld [vmem:[%s573 + $0x60] sm:$0x3f]
    %v587 = vld [vmem:[%s573 + $0x68] sm:$0x3f]
    %v588 = vld [vmem:[%s573 + $0x70] sm:$0x3f]
    %v590 = vsel %vm55, %v584, 0
    %v593 = vsel %vm55, %v585, 0
    %v596 = vsel %vm55, %v586, 0
    %v599 = vsel %vm55, %v587, 0
    %v602 = vsel %vm55, %v588, 0
    %604 = vmatprep.subr.mxu0 %v575
    %605 = vmatpush1.msra.mxu0 %v574
    %606 = vmatprep.subr.mxu0 %v580
    %607 = vmatpush1.msra.mxu0 %v579
    %608 = vmatprep.subr.mxu0 %v593
    %609 = vmatpush1.msra.mxu0 %v590
    %610 = vmatprep.subr.mxu0 0.0
    %611 = vmatpush1.msra.mxu0 0.0
    %612 = vmatprep.subr.mxu0 0.0
    %613 = vmatpush1.msra.mxu0 0.0
    %614 = vmatprep.subr.mxu0 0.0
    %615 = vmatpush1.msra.mxu0 0.0
    %616 = vmatprep.subr.mxu0 0.0
    %617 = vmatpush1.msra.mxu0 0.0
    %618 = vmatprep.subr.mxu0 0.0
    %619 = vmatpush1.msra.mxu0 0.0
    %620 = vmatprep.subr.mxu0 0.0
    %621 = vmatpush1.msra.mxu0 0.0
    %622 = vmatprep.subr.mxu0 0.0
    %623 = vmatpush1.msra.mxu0 0.0
    %624 = vmatprep.subr.mxu0 0.0
    %625 = vmatpush1.msra.mxu0 0.0
    %626 = vmatprep.subr.mxu0 0.0
    %627 = vmatpush1.msra.mxu0 0.0
    %628 = vmatprep.subr.mxu0 0.0
    %629 = vmatpush1.msra.mxu0 0.0
    %630 = vmatprep.subr.mxu0 0.0
    %631 = vmatpush1.msra.mxu0 0.0
    %632 = vmatprep.subr.mxu0 0.0
    %633 = vmatpush1.msra.mxu0 0.0
    %634 = vmatprep.subr.mxu0 0.0
    %635 = vmatpush1.msra.mxu0 0.0
    %636 = vmatprep.subr.mxu0 0.0
    %637 = vmatpush1.msra.mxu0 0.0
    %638 = vmatprep.subr.mxu0 0.0
    %639 = vmatpush1.msra.mxu0 0.0
    %640 = vmatprep.subr.mxu0 0.0
    %641 = vmatpush1.msra.mxu0 0.0
    %642 = vmatprep.subr.mxu0 0.0
    %643 = vmatpush1.msra.mxu0 0.0
    %644 = vmatprep.subr.mxu0 0.0
    %645 = vmatpush1.msra.mxu0 0.0
    %646 = vmatprep.subr.mxu0 0.0
    %647 = vmatpush1.msra.mxu0 0.0
    %648 = vmatprep.subr.mxu0 0.0
    %649 = vmatpush1.msra.mxu0 0.0
    %650 = vmatprep.subr.mxu0 0.0
    %651 = vmatpush1.msra.mxu0 0.0
    %652 = vmatprep.subr.mxu0 0.0
    %653 = vmatpush1.msra.mxu0 0.0
    %654 = vmatprep.subr.mxu0 0.0
    %655 = vmatpush1.msra.mxu0 0.0
    %656 = vmatprep.subr.mxu0 0.0
    %657 = vmatpush1.msra.mxu0 0.0
    %658 = vmatprep.subr.mxu0 0.0
    %659 = vmatpush1.msra.mxu0 0.0
    %660 = vmatprep.subr.mxu0 0.0
    %661 = vmatpush1.msra.mxu0 0.0
    %662 = vmatprep.subr.mxu0 0.0
    %663 = vmatpush1.msra.mxu0 0.0
    %664 = vmatprep.subr.mxu0 0.0
    %665 = vmatpush1.msra.mxu0 0.0
    %666 = vmatprep.subr.mxu0 0.0
    %667 = vmatpush1.msra.mxu0 0.0
    %668 = vmatprep.mubr.f32.mxu0 0.0
    %669 = vmatmul.mubr.f32.gmra.mrb[0].mxu0 %v53
    %v670 = vpop.f32.mrb[0].mxu0
    %v671 = vadd.f32 %v49, %v670
    %v672 = vpop.f32.mrb[0].mxu0
    %v673 = vadd.f32 %v49, %v672
    %674 = vdwg.mxu0
    %675 = vmatprep.subr.mxu0 %v577
    %676 = vmatpush1.msra.mxu0 %v576
    %677 = vmatprep.subr.mxu0 %v582
    %678 = vmatpush1.msra.mxu0 %v581
    %679 = vmatprep.subr.mxu0 %v599
    %680 = vmatpush1.msra.mxu0 %v596
    %681 = vmatprep.subr.mxu0 0.0
    %682 = vmatpush1.msra.mxu0 0.0
    %683 = vmatprep.subr.mxu0 0.0
    %684 = vmatpush1.msra.mxu0 0.0
    %685 = vmatprep.subr.mxu0 0.0
    %686 = vmatpush1.msra.mxu0 0.0
    %687 = vmatprep.subr.mxu0 0.0
    %688 = vmatpush1.msra.mxu0 0.0
    %689 = vmatprep.subr.mxu0 0.0
    %690 = vmatpush1.msra.mxu0 0.0
    %691 = vmatprep.subr.mxu0 0.0
    %692 = vmatpush1.msra.mxu0 0.0
    %693 = vmatprep.subr.mxu0 0.0
    %694 = vmatpush1.msra.mxu0 0.0
    %695 = vmatprep.subr.mxu0 0.0
    %696 = vmatpush1.msra.mxu0 0.0
    %697 = vmatprep.subr.mxu0 0.0
    %698 = vmatpush1.msra.mxu0 0.0
    %699 = vmatprep.subr.mxu0 0.0
    %700 = vmatpush1.msra.mxu0 0.0
    %701 = vmatprep.subr.mxu0 0.0
    %702 = vmatpush1.msra.mxu0 0.0
    %703 = vmatprep.subr.mxu0 0.0
    %704 = vmatpush1.msra.mxu0 0.0
    %705 = vmatprep.subr.mxu0 0.0
    %706 = vmatpush1.msra.mxu0 0.0
    %707 = vmatprep.subr.mxu0 0.0
    %708 = vmatpush1.msra.mxu0 0.0
    %709 = vmatprep.subr.mxu0 0.0
    %710 = vmatpush1.msra.mxu0 0.0
    %711 = vmatprep.subr.mxu0 0.0
    %712 = vmatpush1.msra.mxu0 0.0
    %713 = vmatprep.subr.mxu0 0.0
    %714 = vmatpush1.msra.mxu0 0.0
    %715 = vmatprep.subr.mxu0 0.0
    %716 = vmatpush1.msra.mxu0 0.0
    %717 = vmatprep.subr.mxu0 0.0
    %718 = vmatpush1.msra.mxu0 0.0
    %719 = vmatprep.subr.mxu0 0.0
    %720 = vmatpush1.msra.mxu0 0.0
    %721 = vmatprep.subr.mxu0 0.0
    %722 = vmatpush1.msra.mxu0 0.0
    %723 = vmatprep.subr.mxu0 0.0
    %724 = vmatpush1.msra.mxu0 0.0
    %725 = vmatprep.subr.mxu0 0.0
    %726 = vmatpush1.msra.mxu0 0.0
    %727 = vmatprep.subr.mxu0 0.0
    %728 = vmatpush1.msra.mxu0 0.0
    %729 = vmatprep.subr.mxu0 0.0
    %730 = vmatpush1.msra.mxu0 0.0
    %731 = vmatprep.subr.mxu0 0.0
    %732 = vmatpush1.msra.mxu0 0.0
    %733 = vmatprep.subr.mxu0 0.0
    %734 = vmatpush1.msra.mxu0 0.0
    %735 = vmatprep.subr.mxu0 0.0
    %736 = vmatpush1.msra.mxu0 0.0
    %737 = vmatprep.subr.mxu0 0.0
    %738 = vmatpush1.msra.mxu0 0.0
    %739 = vmatprep.mubr.f32.mxu0 0.0
    %740 = vmatmul.mubr.f32.gmra.mrb[0].mxu0 %v53
    %v741 = vpop.f32.mrb[0].mxu0
    %v742 = vadd.f32 %v49, %v741
    %v743 = vpop.f32.mrb[0].mxu0
    %v744 = vadd.f32 %v49, %v743
    %745 = vdwg.mxu0
    %746 = vmatprep.subr.mxu0 0.0
    %747 = vmatpush1.msra.mxu0 %v578
    %748 = vmatprep.subr.mxu0 0.0
    %749 = vmatpush1.msra.mxu0 %v583
    %750 = vmatprep.subr.mxu0 0.0
    %751 = vmatpush1.msra.mxu0 %v602
    %752 = vmatprep.subr.mxu0 0.0
    %753 = vmatpush1.msra.mxu0 0.0
    %754 = vmatprep.subr.mxu0 0.0
    %755 = vmatpush1.msra.mxu0 0.0
    %756 = vmatprep.subr.mxu0 0.0
    %757 = vmatpush1.msra.mxu0 0.0
    %758 = vmatprep.subr.mxu0 0.0
    %759 = vmatpush1.msra.mxu0 0.0
    %760 = vmatprep.subr.mxu0 0.0
    %761 = vmatpush1.msra.mxu0 0.0
    %762 = vmatprep.subr.mxu0 0.0
    %763 = vmatpush1.msra.mxu0 0.0
    %764 = vmatprep.subr.mxu0 0.0
    %765 = vmatpush1.msra.mxu0 0.0
    %766 = vmatprep.subr.mxu0 0.0
    %767 = vmatpush1.msra.mxu0 0.0
    %768 = vmatprep.subr.mxu0 0.0
    %769 = vmatpush1.msra.mxu0 0.0
    %770 = vmatprep.subr.mxu0 0.0
    %771 = vmatpush1.msra.mxu0 0.0
    %772 = vmatprep.subr.mxu0 0.0
    %773 = vmatpush1.msra.mxu0 0.0
    %774 = vmatprep.subr.mxu0 0.0
    %775 = vmatpush1.msra.mxu0 0.0
    %776 = vmatprep.subr.mxu0 0.0
    %777 = vmatpush1.msra.mxu0 0.0
    %778 = vmatprep.subr.mxu0 0.0
    %779 = vmatpush1.msra.mxu0 0.0
    %780 = vmatprep.subr.mxu0 0.0
    %781 = vmatpush1.msra.mxu0 0.0
    %782 = vmatprep.subr.mxu0 0.0
    %783 = vmatpush1.msra.mxu0 0.0
    %784 = vmatprep.subr.mxu0 0.0
    %785 = vmatpush1.msra.mxu0 0.0
    %786 = vmatprep.subr.mxu0 0.0
    %787 = vmatpush1.msra.mxu0 0.0
    %788 = vmatprep.subr.mxu0 0.0
    %789 = vmatpush1.msra.mxu0 0.0
    %790 = vmatprep.subr.mxu0 0.0
    %791 = vmatpush1.msra.mxu0 0.0
    %792 = vmatprep.subr.mxu0 0.0
    %793 = vmatpush1.msra.mxu0 0.0
    %794 = vmatprep.subr.mxu0 0.0
    %795 = vmatpush1.msra.mxu0 0.0
    %796 = vmatprep.subr.mxu0 0.0
    %797 = vmatpush1.msra.mxu0 0.0
    %798 = vmatprep.subr.mxu0 0.0
    %799 = vmatpush1.msra.mxu0 0.0
    %800 = vmatprep.subr.mxu0 0.0
    %801 = vmatpush1.msra.mxu0 0.0
    %802 = vmatprep.subr.mxu0 0.0
    %803 = vmatpush1.msra.mxu0 0.0
    %804 = vmatprep.subr.mxu0 0.0
    %805 = vmatpush1.msra.mxu0 0.0
    %806 = vmatprep.subr.mxu0 0.0
    %807 = vmatpush1.msra.mxu0 0.0
    %808 = vmatprep.subr.mxu0 0.0
    %809 = vmatpush1.msra.mxu0 0.0
    %810 = vmatprep.mubr.f32.mxu0 0.0
    %811 = vmatmul.mubr.f32.gmra.mrb[0].mxu0 %v53
    %v812 = vpop.f32.mrb[0].mxu0
    %v813 = vadd.f32 %v49, %v812
    %v814 = vpop.f32.mrb[0].mxu0
    %815 = vdwg.mxu0
    %v816 = vmax.f32 %v671, -0.206
    %v817 = vmax.f32 %v673, -0.206
    %v818 = vmax.f32 %v742, -0.206
    %v819 = vmax.f32 %v744, -0.206
    %v820 = vmax.f32 %v813, -0.206
    %v821 = vmin.f32 %v816, -0.00268923
    %v822 = vmin.f32 %v817, -0.00268923
    %v823 = vmin.f32 %v818, -0.00268923
    %v824 = vmin.f32 %v819, -0.00268923
    %v825 = vmin.f32 %v820, -0.00268923
    %v831 = vrot.slane %v821, 2
    %v832 = vrot.slane %v822, 2
    %v833 = vrot.slane %v823, 2
    %v834 = vrot.slane %v824, 2
    %v835 = vrot.slane %v825, 2
    %841 = vst [vmem:[#allocation5] sm:$0xc0] %v831
    %842 = vst [vmem:[#allocation5 + $0x8] sm:$0xc0] %v832
    %843 = vst [vmem:[#allocation5 + $0x10] sm:$0xc0] %v833
    %844 = vst [vmem:[#allocation5 + $0x18] sm:$0xc0] %v834
    %vm845 = vcmask 924678
    %846 = vst.msk [vmem:[#allocation5 + $0x20] sm:$0xc0] %vm845, %v835
    %847 = vst [vmem:[#allocation5 + $0x28] sm:$0x1] %v831
    %848 = vst [vmem:[#allocation5 + $0x30] sm:$0x1] %v832
    %849 = vst [vmem:[#allocation5 + $0x38] sm:$0x1] %v833
    %850 = vst [vmem:[#allocation5 + $0x40] sm:$0x1] %v834
    %vm851 = vcmask 917504
    %852 = vst.msk [vmem:[#allocation5 + $0x48] sm:$0x1] %vm851, %v835
    // Predicated region
    $region18: #{tpu_custom_call.1} parent=1 // pred_check
      _
    $region19: #{tpu_custom_call.1} parent=1 // pred_check_branch
      %854 = sbr.rel (0) target = $region21
    $region20: #{tpu_custom_call.1} parent=1 // pred_region
      %s856 = ssub.s32 1280, 1280
      %857 = vsyncadd [#allocation4], %s856
      %s858 = sshll.u32 [#allocation5], 4
      %s859 = int_to_ptr.vmem [resolvable:$true] %s858
      %864 = dma.vmem_to_hbm [thread:$0]  %s859, 1280, %s3, [#allocation4], 640, 640, 40
    $region21: #{tpu_custom_call.1} parent=1 // pred_fallthru
      _
    // Predicated region
    $region22: #{tpu_custom_call.1} parent=1 // pred_check
      _
    $region23: #{tpu_custom_call.1} parent=1 // pred_check_branch
      %866 = sbr.rel (0) target = $region25
    $region24: #{tpu_custom_call.1} parent=1 // pred_region
      %867 = dma.done [#allocation4], 1280
    $region25: #{tpu_custom_call.1} parent=1 // pred_fallthru
      _
    %868 = vsyncpa [#allocation3], 1
    %869 = vsyncpa [#allocation4], 1

</llo_original>
